<compile_context>
chip_gen: v7x
topology: tpu7x:2x2x1
jax: 0.10.0
libtpu: 0.0.40
codegen_flags: <defaults>
</compile_context>

<pallas_src>
import jax
import jax.numpy as jnp
from jax import lax
from jax.experimental import pallas as pl
from jax.experimental.pallas import tpu as pltpu


def _round_up(x, m):
    return (x + m - 1) // m * m


def _vmem_capacity_bytes():
    try:
        return int(pltpu.get_tpu_info().vmem_capacity_bytes)
    except Exception:
        return 64 << 20  # conservative fallback (v7x physical VMEM per core)


def classifier_kernel(x_ref, w_ref, b_ref, o_ref):
    # ReLU in the input dtype; dropout (eval mode) == identity.
    x = jnp.maximum(x_ref[...], 0.0)
    # Canonical (M, K) x (K, N) contraction on the MXU, f32 accumulation.
    y = lax.dot_general(
        x,
        w_ref[...],
        dimension_numbers=(((1,), (0,)), ((), ())),
        preferred_element_type=jnp.float32,
    )
    o_ref[...] = (y + b_ref[...]).astype(o_ref.dtype)


def classifier_forward(x, weight, bias, *, block_m=1024):
    """x: (B, D_in), weight: (D_out, D_in) (PyTorch layout), bias: (D_out,).

    MXU operand precision follows x.dtype (f32 -> exact parity with the PyTorch
    reference; bf16 -> halved HBM traffic on v6e/v7x). Output dtype == x.dtype.
    """
    B, D_in = x.shape
    D_out, _ = weight.shape
    compute_dtype = x.dtype
    itemsize = jnp.dtype(compute_dtype).itemsize

    # --- N layout -----------------------------------------------------------
    # Tiny head: keep D_out unpadded (block last dim == full array dim is legal);
    # avoids 16x writeback inflation + a post-kernel slice. Bigger head: pad to a
    # multiple of 128 for unmasked lane-dense stores.
    n_out = D_out if D_out < 128 else _round_up(D_out, 128)

    # Pre-transpose (and pad) the weight once, outside the hot loop: (D_in, n_out),
    # lane axis = N. Zero-padded columns produce zero outputs that get sliced off.
    w_t = weight.T
    b1d = bias
    if n_out != D_out:
        w_t = jnp.pad(w_t, ((0, 0), (0, n_out - D_out)))
        b1d = jnp.pad(b1d, (0, n_out - D_out))
    w_t = w_t.astype(compute_dtype)
    b2d = b1d.reshape(1, n_out).astype(jnp.float32)

    # --- M (batch) tiling ----------------------------------------------------
    tm = min(block_m, _round_up(B, 8))
    # >= 2 grid steps when B allows, so the "parallel" axis can feed both v7x
    # TensorCores (harmless on single-TC v5e/v6e).
    if B >= 16 and pl.cdiv(B, tm) < 2:
        tm = _round_up(pl.cdiv(B, 2), 8)
    # Prefer a tile that divides B exactly: avoids a wrapper-side jnp.pad of x,
    # which is a pure extra HBM round trip on a mem-bound kernel. Only shrink the
    # tile down to half its size looking for a divisor; otherwise pad.
    if B % tm != 0:
        for cand in range(tm, max(tm // 2, 8) - 1, -8):
            if B % cand == 0:
                tm = cand
                break
    b_pad = _round_up(B, tm)
    x_p = x if b_pad == B else jnp.pad(x, ((0, b_pad - B), (0, 0)))
    grid = (b_pad // tm,)

    # --- VMEM budget (generation-aware) --------------------------------------
    per_step = tm * D_in * itemsize + tm * n_out * itemsize      # x tile + out tile
    resident = n_out * D_in * itemsize + n_out * 4               # W + bias (single-buffered)
    need = 2 * per_step + resident                               # x/out double-buffered
    cap = int(0.8 * _vmem_capacity_bytes())                      # headroom for compiler scratch
    vmem_bytes = int(min(max(2 * need, 4 << 20), cap))

    out_shape = jax.ShapeDtypeStruct((b_pad, n_out), x.dtype)

    def _call(single_buffer_invariants):
        # W / bias index_maps are constant across the grid -> single-buffer them.
        inv_kwargs = (
            dict(pipeline_mode=pl.Buffered(1)) if single_buffer_invariants else {}
        )
        return pl.pallas_call(
            classifier_kernel,
            out_shape=out_shape,
            grid_spec=pltpu.PrefetchScalarGridSpec(
                num_scalar_prefetch=0,
                grid=grid,
                in_specs=[
                    pl.BlockSpec((tm, D_in), lambda i: (i, 0)),                 # x tile, pipelined
                    pl.BlockSpec((D_in, n_out), lambda i: (0, 0), **inv_kwargs),  # W resident
                    pl.BlockSpec((1, n_out), lambda i: (0, 0), **inv_kwargs),     # bias resident
                ],
                out_specs=pl.BlockSpec((tm, n_out), lambda i: (i, 0)),
            ),
            compiler_params=pltpu.CompilerParams(
                dimension_semantics=("parallel",),
                vmem_limit_bytes=vmem_bytes,
            ),
        )(x_p, w_t, b2d)

    try:
        out = _call(True)
    except Exception:
        # Fallback if pipeline_mode=pl.Buffered(1) is unsupported by this JAX build.
        out = _call(False)

    if b_pad != B or n_out != D_out:
        out = out[:B, :D_out]
    return out


if __name__ == "__main__":
    # Small shapes consistent with the module: input_dim (args.out_dim) = 32,
    # output_dim (args.nclass) = 8, batch = 8.
    batch, input_dim, output_dim = 8, 32, 8

    key = jax.random.PRNGKey(0)
    kx, kw, kb = jax.random.split(key, 3)

    x = jax.random.normal(kx, (batch, input_dim), dtype=jnp.float32)

    # Deterministic parameter init mirroring the module:
    #   nn.init.normal_(self.mlp.weight, std=0.05); bias keeps default uniform init.
    weight = 0.05 * jax.random.normal(kw, (output_dim, input_dim), dtype=jnp.float32)
    bound = 1.0 / jnp.sqrt(jnp.float32(input_dim))
    bias = jax.random.uniform(
        kb, (output_dim,), minval=-bound, maxval=bound, dtype=jnp.float32
    )

    out = classifier_forward(x, weight, bias)
    out = jax.block_until_ready(out)

    # Reference check in plain JAX (relu -> identity dropout -> linear), f32.
    ref = jnp.maximum(x, 0.0) @ weight.T + bias
    assert out.shape == (batch, output_dim)
    assert jnp.allclose(out, ref, atol=1e-2, rtol=1e-2)

    print("KERNEL_OK")
</pallas_src>

<mosaic_0001>
module attributes {stable_mosaic.version = 11 : i64} {
  func.func @classifier_kernel(%arg0: i32, %arg1: memref<8x32xf32, #tpu.memory_space<vmem>>, %arg2: memref<32x8xf32, #tpu.memory_space<vmem>>, %arg3: memref<1x8xf32, #tpu.memory_space<vmem>>, %arg4: memref<8x8xf32, #tpu.memory_space<vmem>>) attributes {dimension_semantics = [#tpu.dimension_semantics<parallel>], iteration_bounds = array<i64: 1>, scalar_prefetch = 0 : i64, scratch_operands = 0 : i64, tpu.core_type = #tpu.core_type<tc>, window_params = [{transform_indices = @transform_0, window_bounds = array<i64: 8, 32>}, {pipeline_mode = #tpu.pipeline_mode<synchronous>, transform_indices = @transform_1, window_bounds = array<i64: 32, 8>}, {pipeline_mode = #tpu.pipeline_mode<synchronous>, transform_indices = @transform_2, window_bounds = array<i64: 1, 8>}, {transform_indices = @transform_3, window_bounds = array<i64: 8, 8>}]} {
    %c0 = arith.constant 0 : index
    %c0_0 = arith.constant 0 : index
    %0 = vector.load %arg1[%c0, %c0_0] : memref<8x32xf32, #tpu.memory_space<vmem>>, vector<8x32xf32>
    %cst = arith.constant 0.000000e+00 : f32
    %1 = vector.broadcast %cst : f32 to vector<8x32xf32>
    %2 = arith.maximumf %0, %1 : vector<8x32xf32>
    %c0_1 = arith.constant 0 : index
    %c0_2 = arith.constant 0 : index
    %3 = vector.load %arg2[%c0_1, %c0_2] : memref<32x8xf32, #tpu.memory_space<vmem>>, vector<32x8xf32>
    %cst_3 = arith.constant dense<0.000000e+00> : vector<8x8xf32>
    %4 = tpu.matmul %2, %3, %cst_3 {dimension_numbers = #tpu.dot_dimension_numbers<[1], [0], [0], [1], [0, 0, 1, 1], [], []>} : vector<8x32xf32>, vector<32x8xf32>, vector<8x8xf32> -> vector<8x8xf32>
    %c0_4 = arith.constant 0 : index
    %c0_5 = arith.constant 0 : index
    %5 = vector.load %arg3[%c0_4, %c0_5] : memref<1x8xf32, #tpu.memory_space<vmem>>, vector<1x8xf32>
    %6 = vector.broadcast %5 : vector<1x8xf32> to vector<8x8xf32>
    %7 = arith.addf %4, %6 : vector<8x8xf32>
    %c0_6 = arith.constant 0 : index
    %c0_7 = arith.constant 0 : index
    %8 = vector.load %arg4[%c0_6, %c0_7] : memref<8x8xf32, #tpu.memory_space<vmem>>, vector<8x8xf32>
    tpu.vector_store %arg4[%c0_6, %c0_7], %7 {strides = array<i32>} : memref<8x8xf32, #tpu.memory_space<vmem>>, vector<8x8xf32>,
    return
  }
  func.func @transform_0(%arg0: i32) -> (i32, i32) {
    %c0_i32 = arith.constant 0 : i32
    %c0_i32_0 = arith.constant 0 : i32
    return %arg0, %c0_i32 : i32, i32
  }
  func.func @transform_1(%arg0: i32) -> (i32, i32) {
    %c0_i32 = arith.constant 0 : i32
    %c0_i32_0 = arith.constant 0 : i32
    %c0_i32_1 = arith.constant 0 : i32
    return %c0_i32, %c0_i32_0 : i32, i32
  }
  func.func @transform_2(%arg0: i32) -> (i32, i32) {
    %c0_i32 = arith.constant 0 : i32
    %c0_i32_0 = arith.constant 0 : i32
    %c0_i32_1 = arith.constant 0 : i32
    return %c0_i32, %c0_i32_0 : i32, i32
  }
  func.func @transform_3(%arg0: i32) -> (i32, i32) {
    %c0_i32 = arith.constant 0 : i32
    %c0_i32_0 = arith.constant 0 : i32
    return %arg0, %c0_i32 : i32, i32
  }
}

module attributes {stable_mosaic.version = 11 : i64} {
  func.func @classifier_kernel(%arg0: i32, %arg1: memref<8x32xf32, #tpu.memory_space<vmem>>, %arg2: memref<32x8xf32, #tpu.memory_space<vmem>>, %arg3: memref<1x8xf32, #tpu.memory_space<vmem>>, %arg4: memref<8x8xf32, #tpu.memory_space<vmem>>) attributes {dimension_semantics = [#tpu.dimension_semantics<parallel>], iteration_bounds = array<i64: 1>, scalar_prefetch = 0 : i64, scratch_operands = 0 : i64, tpu.core_type = #tpu.core_type<tc>, window_params = [{transform_indices = @transform_0, window_bounds = array<i64: 8, 32>}, {pipeline_mode = #tpu.pipeline_mode<synchronous>, transform_indices = @transform_1, window_bounds = array<i64: 32, 8>}, {pipeline_mode = #tpu.pipeline_mode<synchronous>, transform_indices = @transform_2, window_bounds = array<i64: 1, 8>}, {transform_indices = @transform_3, window_bounds = array<i64: 8, 8>}]} {
    %c0 = arith.constant 0 : index
    %c0_0 = arith.constant 0 : index
    %0 = vector.load %arg1[%c0, %c0_0] : memref<8x32xf32, #tpu.memory_space<vmem>>, vector<8x32xf32>
    %cst = arith.constant 0.000000e+00 : f32
    %1 = vector.broadcast %cst : f32 to vector<8x32xf32>
    %2 = arith.maximumf %0, %1 : vector<8x32xf32>
    %c0_1 = arith.constant 0 : index
    %c0_2 = arith.constant 0 : index
    %3 = vector.load %arg2[%c0_1, %c0_2] : memref<32x8xf32, #tpu.memory_space<vmem>>, vector<32x8xf32>
    %cst_3 = arith.constant dense<0.000000e+00> : vector<8x8xf32>
    %4 = tpu.matmul %2, %3, %cst_3 {dimension_numbers = #tpu.dot_dimension_numbers<[1], [0], [0], [1], [0, 0, 1, 1], [], []>} : vector<8x32xf32>, vector<32x8xf32>, vector<8x8xf32> -> vector<8x8xf32>
    %c0_4 = arith.constant 0 : index
    %c0_5 = arith.constant 0 : index
    %5 = vector.load %arg3[%c0_4, %c0_5] : memref<1x8xf32, #tpu.memory_space<vmem>>, vector<1x8xf32>
    %6 = vector.broadcast %5 : vector<1x8xf32> to vector<8x8xf32>
    %7 = arith.addf %4, %6 : vector<8x8xf32>
    %c0_6 = arith.constant 0 : index
    %c0_7 = arith.constant 0 : index
    %8 = vector.load %arg4[%c0_6, %c0_7] : memref<8x8xf32, #tpu.memory_space<vmem>>, vector<8x8xf32>
    tpu.vector_store %arg4[%c0_6, %c0_7], %7 {strides = array<i32>} : memref<8x8xf32, #tpu.memory_space<vmem>>, vector<8x8xf32>,
    return
  }
  func.func @transform_0(%arg0: i32) -> (i32, i32) {
    %c0_i32 = arith.constant 0 : i32
    %c0_i32_0 = arith.constant 0 : i32
    return %arg0, %c0_i32 : i32, i32
  }
  func.func @transform_1(%arg0: i32) -> (i32, i32) {
    %c0_i32 = arith.constant 0 : i32
    %c0_i32_0 = arith.constant 0 : i32
    %c0_i32_1 = arith.constant 0 : i32
    return %c0_i32, %c0_i32_0 : i32, i32
  }
  func.func @transform_2(%arg0: i32) -> (i32, i32) {
    %c0_i32 = arith.constant 0 : i32
    %c0_i32_0 = arith.constant 0 : i32
    %c0_i32_1 = arith.constant 0 : i32
    return %c0_i32, %c0_i32_0 : i32, i32
  }
  func.func @transform_3(%arg0: i32) -> (i32, i32) {
    %c0_i32 = arith.constant 0 : i32
    %c0_i32_0 = arith.constant 0 : i32
    return %arg0, %c0_i32 : i32, i32
  }
}

</mosaic_0001>

<llo_original>
// kernel: tpu_custom_call.1
$region0: #{tpu_custom_call.1}
  #allocation0 [shape = 'u32[]', space=smem, size = 0x4, offset = 0x4, fixed_abs, tag = 'smem constant byte address 0x4 - core index']
  #allocation1 [shape = 'u32[144,128]{1,0:T(1,128)}', space=vmem, size = 0x12000, scoped, tag = 'internal scratch']
  %s0 = inlined_call_operand.vmem [shape: f32[8,32], index: 0, kind: input, shape index: {}]
  %s1 = inlined_call_operand.vmem [shape: f32[32,8], index: 1, kind: input, shape index: {}]
  %s2 = inlined_call_operand.vmem [shape: f32[1,8], index: 2, kind: input, shape index: {}]
  %s3 = inlined_call_operand.hbm [shape: f32[8,8], index: 3, kind: output, shape index: {}]
  %s4 = sld [smem:[#allocation0]]
  $region22: #{tpu_custom_call.1} parent=0
    _
  %s6 = ssub.s32 1, %s4
  %s7 = scalar_select 0, %s6, %s4
  $region1: #{tpu_custom_call.1} parent=0
    #allocation2 [shape = 'u8[4096]{0}', space=vmem, size = 0x1000, scoped, tag = 'output window, operand 0, single buffered']
    #allocation3 [shape = 's32[1]{0}', space=sflag, size = 0x4, scoped, tag = 'scoped memory for tpu_custom_call.1']
    %8 = vsyncpa [#allocation3], 0
    // Predicated region
    $region2: #{tpu_custom_call.1} parent=1 // pred_check
      _
    $region3: #{tpu_custom_call.1} parent=1 // pred_check_branch
      %10 = sbr.rel (0) target = $region5
    $region4: #{tpu_custom_call.1} parent=1 // pred_region
      _
    $region5: #{tpu_custom_call.1} parent=1 // pred_fallthru
      _
    // Predicated region
    $region6: #{tpu_custom_call.1} parent=1 // pred_check
      _
    $region7: #{tpu_custom_call.1} parent=1 // pred_check_branch
      %12 = sbr.rel (0) target = $region9
    $region8: #{tpu_custom_call.1} parent=1 // pred_region
      _
    $region9: #{tpu_custom_call.1} parent=1 // pred_fallthru
      _
    // Predicated region
    $region10: #{tpu_custom_call.1} parent=1 // pred_check
      _
    $region11: #{tpu_custom_call.1} parent=1 // pred_check_branch
      %14 = sbr.rel (0) target = $region13
    $region12: #{tpu_custom_call.1} parent=1 // pred_region
      _
    $region13: #{tpu_custom_call.1} parent=1 // pred_fallthru
      _
    %v15 = vld [vmem:[%s0] sm:$0xff]
    %v16 = vmax.f32 %v15, 0.0
    %v17 = vld [vmem:[%s1] sm:$0xff]
    %v18 = vld [vmem:[%s1 + $0x8] sm:$0xff]
    %v19 = vld [vmem:[%s1 + $0x10] sm:$0xff]
    %v20 = vld [vmem:[%s1 + $0x18] sm:$0xff]
    %v21 = vld [vmem:[%s2] sm:$0x1]
    %v23 = vlaneseq
    %v24 = vshrl.u32 %v23, 7
    %v25 = vsub.s32 0, %v24
    %v26 = vrot.slane %v21, %v25
    %vm28 = vcmask 261120
    %v30 = vsel %vm28, %v16, 0
    %32 = vmatprep.subr.mxu0 0.0
    %33 = vmatpush1.msra.mxu0 %v17
    %34 = vmatprep.subr.mxu0 0.0
    %35 = vmatpush1.msra.mxu0 %v18
    %36 = vmatprep.subr.mxu0 0.0
    %37 = vmatpush1.msra.mxu0 %v19
    %38 = vmatprep.subr.mxu0 0.0
    %39 = vmatpush1.msra.mxu0 %v20
    %40 = vmatprep.subr.mxu0 0.0
    %41 = vmatpush1.msra.mxu0 0.0
    %42 = vmatprep.subr.mxu0 0.0
    %43 = vmatpush1.msra.mxu0 0.0
    %44 = vmatprep.subr.mxu0 0.0
    %45 = vmatpush1.msra.mxu0 0.0
    %46 = vmatprep.subr.mxu0 0.0
    %47 = vmatpush1.msra.mxu0 0.0
    %48 = vmatprep.subr.mxu0 0.0
    %49 = vmatpush1.msra.mxu0 0.0
    %50 = vmatprep.subr.mxu0 0.0
    %51 = vmatpush1.msra.mxu0 0.0
    %52 = vmatprep.subr.mxu0 0.0
    %53 = vmatpush1.msra.mxu0 0.0
    %54 = vmatprep.subr.mxu0 0.0
    %55 = vmatpush1.msra.mxu0 0.0
    %56 = vmatprep.subr.mxu0 0.0
    %57 = vmatpush1.msra.mxu0 0.0
    %58 = vmatprep.subr.mxu0 0.0
    %59 = vmatpush1.msra.mxu0 0.0
    %60 = vmatprep.subr.mxu0 0.0
    %61 = vmatpush1.msra.mxu0 0.0
    %62 = vmatprep.subr.mxu0 0.0
    %63 = vmatpush1.msra.mxu0 0.0
    %64 = vmatprep.subr.mxu0 0.0
    %65 = vmatpush1.msra.mxu0 0.0
    %66 = vmatprep.subr.mxu0 0.0
    %67 = vmatpush1.msra.mxu0 0.0
    %68 = vmatprep.subr.mxu0 0.0
    %69 = vmatpush1.msra.mxu0 0.0
    %70 = vmatprep.subr.mxu0 0.0
    %71 = vmatpush1.msra.mxu0 0.0
    %72 = vmatprep.subr.mxu0 0.0
    %73 = vmatpush1.msra.mxu0 0.0
    %74 = vmatprep.subr.mxu0 0.0
    %75 = vmatpush1.msra.mxu0 0.0
    %76 = vmatprep.subr.mxu0 0.0
    %77 = vmatpush1.msra.mxu0 0.0
    %78 = vmatprep.subr.mxu0 0.0
    %79 = vmatpush1.msra.mxu0 0.0
    %80 = vmatprep.subr.mxu0 0.0
    %81 = vmatpush1.msra.mxu0 0.0
    %82 = vmatprep.subr.mxu0 0.0
    %83 = vmatpush1.msra.mxu0 0.0
    %84 = vmatprep.subr.mxu0 0.0
    %85 = vmatpush1.msra.mxu0 0.0
    %86 = vmatprep.subr.mxu0 0.0
    %87 = vmatpush1.msra.mxu0 0.0
    %88 = vmatprep.subr.mxu0 0.0
    %89 = vmatpush1.msra.mxu0 0.0
    %90 = vmatprep.subr.mxu0 0.0
    %91 = vmatpush1.msra.mxu0 0.0
    %92 = vmatprep.subr.mxu0 0.0
    %93 = vmatpush1.msra.mxu0 0.0
    %94 = vmatprep.subr.mxu0 0.0
    %95 = vmatpush1.msra.mxu0 0.0
    %96 = vmatprep.mubr.f32.mxu0 0.0
    %97 = vmatmul.mubr.f32.gmra.mrb[0].mxu0 %v30
    %v98 = vpop.f32.mrb[0].mxu0
    %v99 = vadd.f32 %v26, %v98
    %v100 = vpop.f32.mrb[0].mxu0
    %101 = vdwg.mxu0
    %vm102 = vcmask 64512
    %103 = vst.msk [vmem:[#allocation2] sm:$0xff] %vm102, %v99
    // Predicated region
    $region14: #{tpu_custom_call.1} parent=1 // pred_check
      _
    $region15: #{tpu_custom_call.1} parent=1 // pred_check_branch
      %105 = sbr.rel (0) target = $region17
    $region16: #{tpu_custom_call.1} parent=1 // pred_region
      %s107 = ssub.s32 128, 128
      %108 = vsyncadd [#allocation3], %s107
      %s110 = sshll.u32 [#allocation2], 4
      %s111 = int_to_ptr.vmem [resolvable:$true] %s110
      %113 = dma.vmem_to_hbm [thread:$0]  %s111, 128, %s3, [#allocation3]
    $region17: #{tpu_custom_call.1} parent=1 // pred_fallthru
      _
    // Predicated region
    $region18: #{tpu_custom_call.1} parent=1 // pred_check
      _
    $region19: #{tpu_custom_call.1} parent=1 // pred_check_branch
      %115 = sbr.rel (0) target = $region21
    $region20: #{tpu_custom_call.1} parent=1 // pred_region
      %116 = dma.done [#allocation3], 128
    $region21: #{tpu_custom_call.1} parent=1 // pred_fallthru
      _
    %117 = vsyncpa [#allocation3], 1

// kernel: tpu_custom_call.1
$region0: #{tpu_custom_call.1}
  #allocation0 [shape = 'u32[]', space=smem, size = 0x4, offset = 0x4, fixed_abs, tag = 'smem constant byte address 0x4 - core index']
  #allocation1 [shape = 'u32[144,128]{1,0:T(1,128)}', space=vmem, size = 0x12000, scoped, tag = 'internal scratch']
  %s0 = inlined_call_operand.vmem [shape: f32[8,32], index: 0, kind: input, shape index: {}]
  %s1 = inlined_call_operand.vmem [shape: f32[32,8], index: 1, kind: input, shape index: {}]
  %s2 = inlined_call_operand.vmem [shape: f32[1,8], index: 2, kind: input, shape index: {}]
  %s3 = inlined_call_operand.hbm [shape: f32[8,8], index: 3, kind: output, shape index: {}]
  %s4 = sld [smem:[#allocation0]]
  $region22: #{tpu_custom_call.1} parent=0
    _
  %s6 = ssub.s32 1, %s4
  %s7 = scalar_select 0, %s6, %s4
  $region1: #{tpu_custom_call.1} parent=0
    #allocation2 [shape = 'u8[4096]{0}', space=vmem, size = 0x1000, scoped, tag = 'output window, operand 0, single buffered']
    #allocation3 [shape = 's32[1]{0}', space=sflag, size = 0x4, scoped, tag = 'scoped memory for tpu_custom_call.1']
    %8 = vsyncpa [#allocation3], 0
    // Predicated region
    $region2: #{tpu_custom_call.1} parent=1 // pred_check
      _
    $region3: #{tpu_custom_call.1} parent=1 // pred_check_branch
      %10 = sbr.rel (0) target = $region5
    $region4: #{tpu_custom_call.1} parent=1 // pred_region
      _
    $region5: #{tpu_custom_call.1} parent=1 // pred_fallthru
      _
    // Predicated region
    $region6: #{tpu_custom_call.1} parent=1 // pred_check
      _
    $region7: #{tpu_custom_call.1} parent=1 // pred_check_branch
      %12 = sbr.rel (0) target = $region9
    $region8: #{tpu_custom_call.1} parent=1 // pred_region
      _
    $region9: #{tpu_custom_call.1} parent=1 // pred_fallthru
      _
    // Predicated region
    $region10: #{tpu_custom_call.1} parent=1 // pred_check
      _
    $region11: #{tpu_custom_call.1} parent=1 // pred_check_branch
      %14 = sbr.rel (0) target = $region13
    $region12: #{tpu_custom_call.1} parent=1 // pred_region
      _
    $region13: #{tpu_custom_call.1} parent=1 // pred_fallthru
      _
    %v15 = vld [vmem:[%s0] sm:$0xff]
    %v16 = vmax.f32 %v15, 0.0
    %v17 = vld [vmem:[%s1] sm:$0xff]
    %v18 = vld [vmem:[%s1 + $0x8] sm:$0xff]
    %v19 = vld [vmem:[%s1 + $0x10] sm:$0xff]
    %v20 = vld [vmem:[%s1 + $0x18] sm:$0xff]
    %v21 = vld [vmem:[%s2] sm:$0x1]
    %v23 = vlaneseq
    %v24 = vshrl.u32 %v23, 7
    %v25 = vsub.s32 0, %v24
    %v26 = vrot.slane %v21, %v25
    %vm28 = vcmask 261120
    %v30 = vsel %vm28, %v16, 0
    %32 = vmatprep.subr.mxu0 0.0
    %33 = vmatpush1.msra.mxu0 %v17
    %34 = vmatprep.subr.mxu0 0.0
    %35 = vmatpush1.msra.mxu0 %v18
    %36 = vmatprep.subr.mxu0 0.0
    %37 = vmatpush1.msra.mxu0 %v19
    %38 = vmatprep.subr.mxu0 0.0
    %39 = vmatpush1.msra.mxu0 %v20
    %40 = vmatprep.subr.mxu0 0.0
    %41 = vmatpush1.msra.mxu0 0.0
    %42 = vmatprep.subr.mxu0 0.0
    %43 = vmatpush1.msra.mxu0 0.0
    %44 = vmatprep.subr.mxu0 0.0
    %45 = vmatpush1.msra.mxu0 0.0
    %46 = vmatprep.subr.mxu0 0.0
    %47 = vmatpush1.msra.mxu0 0.0
    %48 = vmatprep.subr.mxu0 0.0
    %49 = vmatpush1.msra.mxu0 0.0
    %50 = vmatprep.subr.mxu0 0.0
    %51 = vmatpush1.msra.mxu0 0.0
    %52 = vmatprep.subr.mxu0 0.0
    %53 = vmatpush1.msra.mxu0 0.0
    %54 = vmatprep.subr.mxu0 0.0
    %55 = vmatpush1.msra.mxu0 0.0
    %56 = vmatprep.subr.mxu0 0.0
    %57 = vmatpush1.msra.mxu0 0.0
    %58 = vmatprep.subr.mxu0 0.0
    %59 = vmatpush1.msra.mxu0 0.0
    %60 = vmatprep.subr.mxu0 0.0
    %61 = vmatpush1.msra.mxu0 0.0
    %62 = vmatprep.subr.mxu0 0.0
    %63 = vmatpush1.msra.mxu0 0.0
    %64 = vmatprep.subr.mxu0 0.0
    %65 = vmatpush1.msra.mxu0 0.0
    %66 = vmatprep.subr.mxu0 0.0
    %67 = vmatpush1.msra.mxu0 0.0
    %68 = vmatprep.subr.mxu0 0.0
    %69 = vmatpush1.msra.mxu0 0.0
    %70 = vmatprep.subr.mxu0 0.0
    %71 = vmatpush1.msra.mxu0 0.0
    %72 = vmatprep.subr.mxu0 0.0
    %73 = vmatpush1.msra.mxu0 0.0
    %74 = vmatprep.subr.mxu0 0.0
    %75 = vmatpush1.msra.mxu0 0.0
    %76 = vmatprep.subr.mxu0 0.0
    %77 = vmatpush1.msra.mxu0 0.0
    %78 = vmatprep.subr.mxu0 0.0
    %79 = vmatpush1.msra.mxu0 0.0
    %80 = vmatprep.subr.mxu0 0.0
    %81 = vmatpush1.msra.mxu0 0.0
    %82 = vmatprep.subr.mxu0 0.0
    %83 = vmatpush1.msra.mxu0 0.0
    %84 = vmatprep.subr.mxu0 0.0
    %85 = vmatpush1.msra.mxu0 0.0
    %86 = vmatprep.subr.mxu0 0.0
    %87 = vmatpush1.msra.mxu0 0.0
    %88 = vmatprep.subr.mxu0 0.0
    %89 = vmatpush1.msra.mxu0 0.0
    %90 = vmatprep.subr.mxu0 0.0
    %91 = vmatpush1.msra.mxu0 0.0
    %92 = vmatprep.subr.mxu0 0.0
    %93 = vmatpush1.msra.mxu0 0.0
    %94 = vmatprep.subr.mxu0 0.0
    %95 = vmatpush1.msra.mxu0 0.0
    %96 = vmatprep.mubr.f32.mxu0 0.0
    %97 = vmatmul.mubr.f32.gmra.mrb[0].mxu0 %v30
    %v98 = vpop.f32.mrb[0].mxu0
    %v99 = vadd.f32 %v26, %v98
    %v100 = vpop.f32.mrb[0].mxu0
    %101 = vdwg.mxu0
    %vm102 = vcmask 64512
    %103 = vst.msk [vmem:[#allocation2] sm:$0xff] %vm102, %v99
    // Predicated region
    $region14: #{tpu_custom_call.1} parent=1 // pred_check
      _
    $region15: #{tpu_custom_call.1} parent=1 // pred_check_branch
      %105 = sbr.rel (0) target = $region17
    $region16: #{tpu_custom_call.1} parent=1 // pred_region
      %s107 = ssub.s32 128, 128
      %108 = vsyncadd [#allocation3], %s107
      %s110 = sshll.u32 [#allocation2], 4
      %s111 = int_to_ptr.vmem [resolvable:$true] %s110
      %113 = dma.vmem_to_hbm [thread:$0]  %s111, 128, %s3, [#allocation3]
    $region17: #{tpu_custom_call.1} parent=1 // pred_fallthru
      _
    // Predicated region
    $region18: #{tpu_custom_call.1} parent=1 // pred_check
      _
    $region19: #{tpu_custom_call.1} parent=1 // pred_check_branch
      %115 = sbr.rel (0) target = $region21
    $region20: #{tpu_custom_call.1} parent=1 // pred_region
      %116 = dma.done [#allocation3], 128
    $region21: #{tpu_custom_call.1} parent=1 // pred_fallthru
      _
    %117 = vsyncpa [#allocation3], 1

</llo_original>
